<compile_context>
chip_gen: v7x
topology: tpu7x:2x2x1
jax: 0.10.0
libtpu: 0.0.40
codegen_flags: <defaults>
</compile_context>

<pallas_src>
import jax
import jax.numpy as jnp
from jax.experimental import pallas as pl
from jax.experimental.pallas import tpu as pltpu


def mlp_kernel(xt_ref, w1_ref, b1_ref, w2_ref, b2_ref, w3t_ref, b3_ref, o_ref):
    xt = xt_ref[...]                                            # (1, Bp) lane-dense

    # Layer 1: K=1 contraction -> broadcast outer product on the VPU.
    #   h1^T = W1 @ x^T + b1  ==  w1(H1,1) * xt(1,Bp) + b1(H1,1)
    h1 = jnp.maximum(w1_ref[...] * xt + b1_ref[...], 0.0)       # (H1, Bp)

    # Layer 2: full 32x32 contraction -> MXU, f32 accumulation.
    #   h2^T = W2 @ h1^T + b2
    h2 = jnp.dot(w2_ref[...], h1, preferred_element_type=jnp.float32)
    h2 = jnp.maximum(h2 + b2_ref[...], 0.0)                     # (H2, Bp)

    # Layer 3: N=1 contraction -> VPU multiply + cross-sublane reduce (XLU).
    #   out^T = W3 @ h2^T + b3  ==  sum_f (w3^T(H2,1) * h2^T(H2,Bp)) + b3
    out = jnp.sum(w3t_ref[...] * h2, axis=0, keepdims=True) + b3_ref[...]  # (1, Bp)
    o_ref[...] = out.astype(o_ref.dtype)


def net_forward(x, params):
    """Fused forward pass. x: (B, n_features=1). Weights in PyTorch layout."""
    w1, b1, w2, b2, w3, b3 = params  # w: (out, in), b: (out,)
    B = x.shape[0]
    Bp = ((B + 127) // 128) * 128    # pad batch to a full 128-lane multiple

    # Transposed, lane-dense activation layout: (features, batch_padded).
    xt = jnp.zeros((1, Bp), jnp.float32).at[:, :B].set(x.astype(jnp.float32).T)
    b1c = b1.reshape(-1, 1).astype(jnp.float32)   # (H1, 1)
    b2c = b2.reshape(-1, 1).astype(jnp.float32)   # (H2, 1)
    b3c = b3.reshape(-1, 1).astype(jnp.float32)   # (1, 1)
    w3t = w3.T.astype(jnp.float32)                # (H2, 1)

    h1, h2 = w1.shape[0], w2.shape[0]
    n_out = w3.shape[0]

    # Everything fits comfortably in VMEM -> single fused kernel, single step.
    # Full-array blocks (block_shape == array shape), grid=().
    full = lambda a: pl.BlockSpec(a.shape, lambda: tuple(0 for _ in a.shape))

    flops = 2 * h1 * Bp + 2 * h2 * h1 * Bp + 2 * n_out * h2 * Bp
    bytes_accessed = 4 * (Bp + h1 + h1 + h2 * h1 + h2 + h2 + n_out + n_out * Bp)
    ce = pl.CostEstimate(flops=flops, transcendentals=0,
                         bytes_accessed=bytes_accessed)

    out_t = pl.pallas_call(
        mlp_kernel,
        out_shape=jax.ShapeDtypeStruct((n_out, Bp), jnp.float32),
        grid=(),
        in_specs=[full(xt), full(w1), full(b1c), full(w2), full(b2c),
                  full(w3t), full(b3c)],
        out_specs=pl.BlockSpec((n_out, Bp), lambda: (0, 0)),
        cost_estimate=ce,
    )(xt, w1.astype(jnp.float32), b1c, w2.astype(jnp.float32), b2c, w3t, b3c)

    # Un-transpose and drop batch padding -> (B, n_out), matching PyTorch.
    return out_t[:, :B].T
    # TODO(synk): if batch ever scales to >>10K rows, add a "parallel" batch
    # grid axis with weight-resident BlockSpecs sized against v7x's 64 MiB VMEM.


def init_linear(key, fan_in, fan_out):
    """Deterministic init mimicking torch.nn.Linear (uniform +/- 1/sqrt(fan_in)).
    Weight returned in PyTorch layout (out_features, in_features)."""
    kw, kb = jax.random.split(key)
    bound = 1.0 / jnp.sqrt(fan_in)
    w = jax.random.uniform(kw, (fan_out, fan_in), jnp.float32, -bound, bound)
    b = jax.random.uniform(kb, (fan_out,), jnp.float32, -bound, bound)
    return w, b


def reference_forward(x, params):
    w1, b1, w2, b2, w3, b3 = params
    h1 = jnp.maximum(x @ w1.T + b1, 0.0)
    h2 = jnp.maximum(h1 @ w2.T + b2, 0.0)
    return h2 @ w3.T + b3


if __name__ == "__main__":
    # Mirror the torch script: x = unsqueeze(linspace(-1, 1, 100), dim=1) -> (100, 1)
    n_features, n_hidden1, n_hidden2, n_output = 1, 32, 32, 1
    batch = 100

    key = jax.random.PRNGKey(0)
    k1, k2, k3 = jax.random.split(key, 3)
    w1, b1 = init_linear(k1, n_features, n_hidden1)
    w2, b2 = init_linear(k2, n_hidden1, n_hidden2)
    w3, b3 = init_linear(k3, n_hidden2, n_output)
    params = (w1, b1, w2, b2, w3, b3)

    x = jnp.linspace(-1.0, 1.0, batch, dtype=jnp.float32)[:, None]  # (100, 1)

    y = net_forward(x, params)
    y = jax.block_until_ready(y)

    y_ref = reference_forward(x, params)
    assert y.shape == (batch, n_output)
    assert jnp.allclose(y, y_ref, atol=1e-5, rtol=1e-5)

    print("KERNEL_OK")
</pallas_src>

<mosaic_0001>
module attributes {stable_mosaic.version = 11 : i64} {
  func.func @mlp_kernel(%arg0: memref<1x128xf32, #tpu.memory_space<vmem>>, %arg1: memref<32x1xf32, #tpu.memory_space<vmem>>, %arg2: memref<32x1xf32, #tpu.memory_space<vmem>>, %arg3: memref<32x32xf32, #tpu.memory_space<vmem>>, %arg4: memref<32x1xf32, #tpu.memory_space<vmem>>, %arg5: memref<32x1xf32, #tpu.memory_space<vmem>>, %arg6: memref<1x1xf32, #tpu.memory_space<vmem>>, %arg7: memref<1x128xf32, #tpu.memory_space<vmem>>) attributes {dimension_semantics = [], scalar_prefetch = 0 : i64, scratch_operands = 0 : i64, tpu.core_type = #tpu.core_type<tc>} {
    %c0 = arith.constant 0 : index
    %c0_0 = arith.constant 0 : index
    %0 = vector.load %arg0[%c0, %c0_0] : memref<1x128xf32, #tpu.memory_space<vmem>>, vector<1x128xf32>
    %c0_1 = arith.constant 0 : index
    %c0_2 = arith.constant 0 : index
    %1 = vector.load %arg1[%c0_1, %c0_2] : memref<32x1xf32, #tpu.memory_space<vmem>>, vector<32x1xf32>
    %2 = vector.broadcast %1 : vector<32x1xf32> to vector<32x128xf32>
    %3 = vector.broadcast %0 : vector<1x128xf32> to vector<32x128xf32>
    %4 = arith.mulf %2, %3 : vector<32x128xf32>
    %c0_3 = arith.constant 0 : index
    %c0_4 = arith.constant 0 : index
    %5 = vector.load %arg2[%c0_3, %c0_4] : memref<32x1xf32, #tpu.memory_space<vmem>>, vector<32x1xf32>
    %6 = vector.broadcast %5 : vector<32x1xf32> to vector<32x128xf32>
    %7 = arith.addf %4, %6 : vector<32x128xf32>
    %cst = arith.constant 0.000000e+00 : f32
    %8 = vector.broadcast %cst : f32 to vector<32x128xf32>
    %9 = arith.maximumf %7, %8 : vector<32x128xf32>
    %c0_5 = arith.constant 0 : index
    %c0_6 = arith.constant 0 : index
    %10 = vector.load %arg3[%c0_5, %c0_6] : memref<32x32xf32, #tpu.memory_space<vmem>>, vector<32x32xf32>
    %cst_7 = arith.constant dense<0.000000e+00> : vector<32x128xf32>
    %11 = tpu.matmul %10, %9, %cst_7 {dimension_numbers = #tpu.dot_dimension_numbers<[1], [0], [0], [1], [0, 0, 1, 1], [], []>} : vector<32x32xf32>, vector<32x128xf32>, vector<32x128xf32> -> vector<32x128xf32>
    %c0_8 = arith.constant 0 : index
    %c0_9 = arith.constant 0 : index
    %12 = vector.load %arg4[%c0_8, %c0_9] : memref<32x1xf32, #tpu.memory_space<vmem>>, vector<32x1xf32>
    %13 = vector.broadcast %12 : vector<32x1xf32> to vector<32x128xf32>
    %14 = arith.addf %11, %13 : vector<32x128xf32>
    %cst_10 = arith.constant 0.000000e+00 : f32
    %15 = vector.broadcast %cst_10 : f32 to vector<32x128xf32>
    %16 = arith.maximumf %14, %15 : vector<32x128xf32>
    %c0_11 = arith.constant 0 : index
    %c0_12 = arith.constant 0 : index
    %17 = vector.load %arg5[%c0_11, %c0_12] : memref<32x1xf32, #tpu.memory_space<vmem>>, vector<32x1xf32>
    %18 = vector.broadcast %17 : vector<32x1xf32> to vector<32x128xf32>
    %19 = arith.mulf %18, %16 : vector<32x128xf32>
    %cst_13 = arith.constant dense<0.000000e+00> : vector<128xf32>
    %20 = vector.multi_reduction <add>, %19, %cst_13 [0] : vector<32x128xf32> to vector<128xf32>
    %21 = vector.shape_cast %20 : vector<128xf32> to vector<1x128xf32>
    %c0_14 = arith.constant 0 : index
    %c0_15 = arith.constant 0 : index
    %22 = vector.load %arg6[%c0_14, %c0_15] : memref<1x1xf32, #tpu.memory_space<vmem>>, vector<1x1xf32>
    %23 = vector.broadcast %22 : vector<1x1xf32> to vector<1x128xf32>
    %24 = arith.addf %21, %23 : vector<1x128xf32>
    %c0_16 = arith.constant 0 : index
    %c0_17 = arith.constant 0 : index
    %25 = vector.load %arg7[%c0_16, %c0_17] : memref<1x128xf32, #tpu.memory_space<vmem>>, vector<1x128xf32>
    tpu.vector_store %arg7[%c0_16, %c0_17], %24 {strides = array<i32>} : memref<1x128xf32, #tpu.memory_space<vmem>>, vector<1x128xf32>,
    return
  }
}

</mosaic_0001>

<llo_original>
// kernel: tpu_custom_call.1
$region0: #{tpu_custom_call.1}
  #allocation0 [shape = 'u32[]', space=smem, size = 0x4, offset = 0x4, fixed_abs, tag = 'smem constant byte address 0x4 - core index']
  #allocation1 [shape = 'u32[144,128]{1,0:T(1,128)}', space=vmem, size = 0x12000, scoped, tag = 'internal scratch']
  #allocation2 [shape = 'f32[1,1]{1,0:T(1,128)S(1)}', space=vmem, size = 0x200, scoped, tag = 'scoped memory for tpu_custom_call.1']
  %s0 = inlined_call_operand.vmem [shape: f32[1,128], index: 0, kind: input, shape index: {}]
  %s1 = inlined_call_operand.vmem [shape: f32[32,1], index: 1, kind: input, shape index: {}]
  %s2 = inlined_call_operand.vmem [shape: f32[32,1], index: 2, kind: input, shape index: {}]
  %s3 = inlined_call_operand.vmem [shape: f32[32,32], index: 3, kind: input, shape index: {}]
  %s4 = inlined_call_operand.vmem [shape: f32[32,1], index: 4, kind: input, shape index: {}]
  %s5 = inlined_call_operand.vmem [shape: f32[32,1], index: 5, kind: input, shape index: {}]
  %s6 = inlined_call_operand.<no memory space> [shape: f32[1,1], index: 6, kind: input, shape index: {}]
  %s7 = inlined_call_operand.hbm [shape: f32[1,128], index: 7, kind: output, shape index: {}]
  %s8 = sld [smem:[#allocation0]]
  $region38: #{tpu_custom_call.1} parent=0
    _
  %s10 = ssub.s32 1, %s8
  %s11 = scalar_select 0, %s10, %s8
  %v12 = vstv %s6
  %13 = vst [vmem:[#allocation2] sm:$0x1] %v12
  $region1: #{tpu_custom_call.1} parent=0
    #allocation3 [shape = 'u8[512]{0}', space=vmem, size = 0x400, scoped, tag = 'output window, operand 0, single buffered']
    #allocation4 [shape = 's32[1]{0}', space=sflag, size = 0x4, scoped, tag = 'scoped memory for tpu_custom_call.1']
    %14 = vsyncpa [#allocation4], 0
    // Predicated region
    $region2: #{tpu_custom_call.1} parent=1 // pred_check
      _
    $region3: #{tpu_custom_call.1} parent=1 // pred_check_branch
      %16 = sbr.rel (0) target = $region5
    $region4: #{tpu_custom_call.1} parent=1 // pred_region
      _
    $region5: #{tpu_custom_call.1} parent=1 // pred_fallthru
      _
    // Predicated region
    $region6: #{tpu_custom_call.1} parent=1 // pred_check
      _
    $region7: #{tpu_custom_call.1} parent=1 // pred_check_branch
      %18 = sbr.rel (0) target = $region9
    $region8: #{tpu_custom_call.1} parent=1 // pred_region
      _
    $region9: #{tpu_custom_call.1} parent=1 // pred_fallthru
      _
    // Predicated region
    $region10: #{tpu_custom_call.1} parent=1 // pred_check
      _
    $region11: #{tpu_custom_call.1} parent=1 // pred_check_branch
      %20 = sbr.rel (0) target = $region13
    $region12: #{tpu_custom_call.1} parent=1 // pred_region
      _
    $region13: #{tpu_custom_call.1} parent=1 // pred_fallthru
      _
    // Predicated region
    $region14: #{tpu_custom_call.1} parent=1 // pred_check
      _
    $region15: #{tpu_custom_call.1} parent=1 // pred_check_branch
      %22 = sbr.rel (0) target = $region17
    $region16: #{tpu_custom_call.1} parent=1 // pred_region
      _
    $region17: #{tpu_custom_call.1} parent=1 // pred_fallthru
      _
    // Predicated region
    $region18: #{tpu_custom_call.1} parent=1 // pred_check
      _
    $region19: #{tpu_custom_call.1} parent=1 // pred_check_branch
      %24 = sbr.rel (0) target = $region21
    $region20: #{tpu_custom_call.1} parent=1 // pred_region
      _
    $region21: #{tpu_custom_call.1} parent=1 // pred_fallthru
      _
    // Predicated region
    $region22: #{tpu_custom_call.1} parent=1 // pred_check
      _
    $region23: #{tpu_custom_call.1} parent=1 // pred_check_branch
      %26 = sbr.rel (0) target = $region25
    $region24: #{tpu_custom_call.1} parent=1 // pred_region
      _
    $region25: #{tpu_custom_call.1} parent=1 // pred_fallthru
      _
    // Predicated region
    $region26: #{tpu_custom_call.1} parent=1 // pred_check
      _
    $region27: #{tpu_custom_call.1} parent=1 // pred_check_branch
      %28 = sbr.rel (0) target = $region29
    $region28: #{tpu_custom_call.1} parent=1 // pred_region
      _
    $region29: #{tpu_custom_call.1} parent=1 // pred_fallthru
      _
    %v29 = vld [vmem:[%s0] sm:$0x1]
    %v30 = vld [vmem:[%s1] sm:$0xff]
    %v31 = vld [vmem:[%s1 + $0x8] sm:$0xff]
    %v32 = vld [vmem:[%s1 + $0x10] sm:$0xff]
    %v33 = vld [vmem:[%s1 + $0x18] sm:$0xff]
    %35 = vset.pattern.permute.xlu0 0
    %36 = vperm.xlu0 %35, %v30
    %v37 = vpop.permute.xlu0 %36
    %40 = vset.pattern.permute.xlu0 0
    %41 = vperm.xlu0 %40, %v31
    %v42 = vpop.permute.xlu0 %41
    %45 = vset.pattern.permute.xlu0 0
    %46 = vperm.xlu0 %45, %v32
    %v47 = vpop.permute.xlu0 %46
    %50 = vset.pattern.permute.xlu0 0
    %51 = vperm.xlu0 %50, %v33
    %v52 = vpop.permute.xlu0 %51
    %v55 = vlaneseq
    %v56 = vshrl.u32 %v55, 7
    %v57 = vsub.s32 0, %v56
    %v58 = vrot.slane %v29, %v57
    %v60 = vmul.f32 %v37, %v58
    %v61 = vmul.f32 %v42, %v58
    %v62 = vmul.f32 %v47, %v58
    %v63 = vmul.f32 %v52, %v58
    %v64 = vld [vmem:[%s2] sm:$0xff]
    %v65 = vld [vmem:[%s2 + $0x8] sm:$0xff]
    %v66 = vld [vmem:[%s2 + $0x10] sm:$0xff]
    %v67 = vld [vmem:[%s2 + $0x18] sm:$0xff]
    %69 = vset.pattern.permute.xlu0 0
    %70 = vperm.xlu0 %69, %v64
    %v71 = vpop.permute.xlu0 %70
    %74 = vset.pattern.permute.xlu0 0
    %75 = vperm.xlu0 %74, %v65
    %v76 = vpop.permute.xlu0 %75
    %79 = vset.pattern.permute.xlu0 0
    %80 = vperm.xlu0 %79, %v66
    %v81 = vpop.permute.xlu0 %80
    %84 = vset.pattern.permute.xlu0 0
    %85 = vperm.xlu0 %84, %v67
    %v86 = vpop.permute.xlu0 %85
    %v88 = vadd.f32 %v60, %v71
    %v89 = vadd.f32 %v61, %v76
    %v90 = vadd.f32 %v62, %v81
    %v91 = vadd.f32 %v63, %v86
    %v92 = vmax.f32 %v88, 0.0
    %v93 = vmax.f32 %v89, 0.0
    %v94 = vmax.f32 %v90, 0.0
    %v95 = vmax.f32 %v91, 0.0
    %v96 = vld [vmem:[%s3] sm:$0xff]
    %v97 = vld [vmem:[%s3 + $0x8] sm:$0xff]
    %v98 = vld [vmem:[%s3 + $0x10] sm:$0xff]
    %v99 = vld [vmem:[%s3 + $0x18] sm:$0xff]
    %v100 = vld [vmem:[%s4] sm:$0xff]
    %v101 = vld [vmem:[%s4 + $0x8] sm:$0xff]
    %v102 = vld [vmem:[%s4 + $0x10] sm:$0xff]
    %v103 = vld [vmem:[%s4 + $0x18] sm:$0xff]
    %105 = vset.pattern.permute.xlu0 0
    %106 = vperm.xlu0 %105, %v100
    %v107 = vpop.permute.xlu0 %106
    %110 = vset.pattern.permute.xlu0 0
    %111 = vperm.xlu0 %110, %v101
    %v112 = vpop.permute.xlu0 %111
    %115 = vset.pattern.permute.xlu0 0
    %116 = vperm.xlu0 %115, %v102
    %v117 = vpop.permute.xlu0 %116
    %120 = vset.pattern.permute.xlu0 0
    %121 = vperm.xlu0 %120, %v103
    %v122 = vpop.permute.xlu0 %121
    %vm124 = vcmask 261120
    %v126 = vsel %vm124, %v96, 0
    %v129 = vsel %vm124, %v97, 0
    %v132 = vsel %vm124, %v98, 0
    %v135 = vsel %vm124, %v99, 0
    %137 = vmatprep.subr.mxu0 0.0
    %138 = vmatpush1.msra.mxu0 %v92
    %139 = vmatprep.subr.mxu0 0.0
    %140 = vmatpush1.msra.mxu0 %v93
    %141 = vmatprep.subr.mxu0 0.0
    %142 = vmatpush1.msra.mxu0 %v94
    %143 = vmatprep.subr.mxu0 0.0
    %144 = vmatpush1.msra.mxu0 %v95
    %145 = vmatprep.subr.mxu0 0.0
    %146 = vmatpush1.msra.mxu0 0.0
    %147 = vmatprep.subr.mxu0 0.0
    %148 = vmatpush1.msra.mxu0 0.0
    %149 = vmatprep.subr.mxu0 0.0
    %150 = vmatpush1.msra.mxu0 0.0
    %151 = vmatprep.subr.mxu0 0.0
    %152 = vmatpush1.msra.mxu0 0.0
    %153 = vmatprep.subr.mxu0 0.0
    %154 = vmatpush1.msra.mxu0 0.0
    %155 = vmatprep.subr.mxu0 0.0
    %156 = vmatpush1.msra.mxu0 0.0
    %157 = vmatprep.subr.mxu0 0.0
    %158 = vmatpush1.msra.mxu0 0.0
    %159 = vmatprep.subr.mxu0 0.0
    %160 = vmatpush1.msra.mxu0 0.0
    %161 = vmatprep.subr.mxu0 0.0
    %162 = vmatpush1.msra.mxu0 0.0
    %163 = vmatprep.subr.mxu0 0.0
    %164 = vmatpush1.msra.mxu0 0.0
    %165 = vmatprep.subr.mxu0 0.0
    %166 = vmatpush1.msra.mxu0 0.0
    %167 = vmatprep.subr.mxu0 0.0
    %168 = vmatpush1.msra.mxu0 0.0
    %169 = vmatprep.subr.mxu0 0.0
    %170 = vmatpush1.msra.mxu0 0.0
    %171 = vmatprep.subr.mxu0 0.0
    %172 = vmatpush1.msra.mxu0 0.0
    %173 = vmatprep.subr.mxu0 0.0
    %174 = vmatpush1.msra.mxu0 0.0
    %175 = vmatprep.subr.mxu0 0.0
    %176 = vmatpush1.msra.mxu0 0.0
    %177 = vmatprep.subr.mxu0 0.0
    %178 = vmatpush1.msra.mxu0 0.0
    %179 = vmatprep.subr.mxu0 0.0
    %180 = vmatpush1.msra.mxu0 0.0
    %181 = vmatprep.subr.mxu0 0.0
    %182 = vmatpush1.msra.mxu0 0.0
    %183 = vmatprep.subr.mxu0 0.0
    %184 = vmatpush1.msra.mxu0 0.0
    %185 = vmatprep.subr.mxu0 0.0
    %186 = vmatpush1.msra.mxu0 0.0
    %187 = vmatprep.subr.mxu0 0.0
    %188 = vmatpush1.msra.mxu0 0.0
    %189 = vmatprep.subr.mxu0 0.0
    %190 = vmatpush1.msra.mxu0 0.0
    %191 = vmatprep.subr.mxu0 0.0
    %192 = vmatpush1.msra.mxu0 0.0
    %193 = vmatprep.subr.mxu0 0.0
    %194 = vmatpush1.msra.mxu0 0.0
    %195 = vmatprep.subr.mxu0 0.0
    %196 = vmatpush1.msra.mxu0 0.0
    %197 = vmatprep.subr.mxu0 0.0
    %198 = vmatpush1.msra.mxu0 0.0
    %199 = vmatprep.subr.mxu0 0.0
    %200 = vmatpush1.msra.mxu0 0.0
    %201 = vmatprep.mubr.f32.mxu0 0.0
    %202 = vmatmul.mubr.f32.gmra.mrb[0].mxu0 %v126
    %v203 = vpop.f32.mrb[0].mxu0
    %v204 = vadd.f32 %v107, %v203
    %v205 = vpop.f32.mrb[0].mxu0
    %206 = vmatprep.mubr.f32.mxu0 0.0
    %207 = vmatmul.mubr.f32.gmra.mrb[0].mxu0 %v129
    %v208 = vpop.f32.mrb[0].mxu0
    %v209 = vadd.f32 %v112, %v208
    %v210 = vpop.f32.mrb[0].mxu0
    %211 = vmatprep.mubr.f32.mxu0 0.0
    %212 = vmatmul.mubr.f32.gmra.mrb[0].mxu0 %v132
    %v213 = vpop.f32.mrb[0].mxu0
    %v214 = vadd.f32 %v117, %v213
    %v215 = vpop.f32.mrb[0].mxu0
    %216 = vmatprep.mubr.f32.mxu0 0.0
    %217 = vmatmul.mubr.f32.gmra.mrb[0].mxu0 %v135
    %v218 = vpop.f32.mrb[0].mxu0
    %v219 = vadd.f32 %v122, %v218
    %v220 = vpop.f32.mrb[0].mxu0
    %221 = vdwg.mxu0
    %v222 = vmax.f32 %v204, 0.0
    %v223 = vmax.f32 %v209, 0.0
    %v224 = vmax.f32 %v214, 0.0
    %v225 = vmax.f32 %v219, 0.0
    %v226 = vld [vmem:[%s5] sm:$0xff]
    %v227 = vld [vmem:[%s5 + $0x8] sm:$0xff]
    %v228 = vld [vmem:[%s5 + $0x10] sm:$0xff]
    %v229 = vld [vmem:[%s5 + $0x18] sm:$0xff]
    %231 = vset.pattern.permute.xlu0 0
    %232 = vperm.xlu0 %231, %v226
    %v233 = vpop.permute.xlu0 %232
    %236 = vset.pattern.permute.xlu0 0
    %237 = vperm.xlu0 %236, %v227
    %v238 = vpop.permute.xlu0 %237
    %241 = vset.pattern.permute.xlu0 0
    %242 = vperm.xlu0 %241, %v228
    %v243 = vpop.permute.xlu0 %242
    %246 = vset.pattern.permute.xlu0 0
    %247 = vperm.xlu0 %246, %v229
    %v248 = vpop.permute.xlu0 %247
    %v250 = vmul.f32 %v233, %v222
    %v251 = vmul.f32 %v238, %v223
    %v252 = vmul.f32 %v243, %v224
    %v253 = vmul.f32 %v248, %v225
    %v254 = vadd.f32 %v250, %v251
    %v255 = vadd.f32 %v254, %v252
    %v256 = vadd.f32 %v255, %v253
    %v257 = vrot.slane %v256, 4
    %v258 = vadd.f32 %v256, %v257
    %v259 = vrot.slane %v258, 2
    %v260 = vadd.f32 %v258, %v259
    %v261 = vrot.slane %v260, 1
    %v262 = vadd.f32 %v260, %v261
    %v263 = vld [vmem:[#allocation2] sm:$0x1]
    %265 = vset.pattern.permute.xlu0 0
    %266 = vperm.xlu0 %265, %v263
    %v267 = vpop.permute.xlu0 %266
    %v269 = vlaneseq
    %v270 = vshrl.u32 %v269, 7
    %v271 = vsub.s32 0, %v270
    %v272 = vrot.slane %v267, %v271
    %v273 = vadd.f32 %v262, %v272
    %274 = vst [vmem:[#allocation3] sm:$0x1] %v273
    // Predicated region
    $region30: #{tpu_custom_call.1} parent=1 // pred_check
      _
    $region31: #{tpu_custom_call.1} parent=1 // pred_check_branch
      %276 = sbr.rel (0) target = $region33
    $region32: #{tpu_custom_call.1} parent=1 // pred_region
      %s278 = ssub.s32 16, 16
      %279 = vsyncadd [#allocation4], %s278
      %s281 = sshll.u32 [#allocation3], 4
      %s282 = int_to_ptr.vmem [resolvable:$true] %s281
      %284 = dma.vmem_to_hbm [thread:$0]  %s282, 16, %s7, [#allocation4]
    $region33: #{tpu_custom_call.1} parent=1 // pred_fallthru
      _
    // Predicated region
    $region34: #{tpu_custom_call.1} parent=1 // pred_check
      _
    $region35: #{tpu_custom_call.1} parent=1 // pred_check_branch
      %286 = sbr.rel (0) target = $region37
    $region36: #{tpu_custom_call.1} parent=1 // pred_region
      %287 = dma.done [#allocation4], 16
    $region37: #{tpu_custom_call.1} parent=1 // pred_fallthru
      _
    %288 = vsyncpa [#allocation4], 1

</llo_original>
